<compile_context>
chip_gen: v7x
topology: tpu7x:2x2x1
jax: 0.10.0
libtpu: 0.0.40
codegen_flags: <defaults>
</compile_context>

<pallas_src>
import functools

import jax
import jax.numpy as jnp
from jax import lax
from jax.experimental import pallas as pl
from jax.experimental.pallas import tpu as pltpu


def _grad_xy(x):
    """Shift-difference gradients with zero padding on the first row/col.

    x: (..., H, W) float32. Returns (dx, dy) of the same shape:
      dy[..., i, j] = x[i, j] - x[i-1, j]   (dy[..., 0, :]  = x[..., 0, :])
      dx[..., i, j] = x[i, j] - x[i, j-1]   (dx[..., :, 0]  = x[..., :, 0])
    """
    h_ax, w_ax = x.ndim - 2, x.ndim - 1
    row = lax.broadcasted_iota(jnp.int32, x.shape, h_ax)
    col = lax.broadcasted_iota(jnp.int32, x.shape, w_ax)
    up = pltpu.roll(x, shift=1, axis=h_ax)       # up[i]   = x[i-1] (wraps at 0)
    left = pltpu.roll(x, shift=1, axis=w_ax)     # left[j] = x[j-1] (wraps at 0)
    dy = x - jnp.where(row == 0, 0.0, up)
    dx = x - jnp.where(col == 0, 0.0, left)
    return dx, dy


def _smoothness_kernel(dpt_ref, tgt_ref, out_ref, *, scale):
    # Cast in-kernel: DMA moves native dtype bytes, compute runs in f32.
    dpt = dpt_ref[...].astype(jnp.float32)      # (TB, H, W)
    tgt = tgt_ref[...].astype(jnp.float32)      # (TB, C, H, W)

    d_dx, d_dy = _grad_xy(dpt)                  # (TB, H, W)
    g_dx, g_dy = _grad_xy(tgt)                  # (TB, C, H, W)

    # sum_c |dx| * exp(-|g_dx_c|) = |dx| * sum_c exp(-|g_dx_c|)
    wx = jnp.sum(jnp.exp(-jnp.abs(g_dx)), axis=1)    # (TB, H, W)
    wy = jnp.sum(jnp.exp(-jnp.abs(g_dy)), axis=1)    # (TB, H, W)
    dD = jnp.abs(d_dx) * wx + jnp.abs(d_dy) * wy     # (TB, H, W)

    # One pre-normalized partial per grid block, lane-dense (8,128) tile.
    out_ref[...] = jnp.broadcast_to(jnp.sum(dD) * scale, out_ref.shape)


def _pick_batch_tile(B, C, H, W, itemsize, budget_bytes=8 << 20):
    """Largest divisor of B whose double-buffered block footprint fits."""
    per_item = (C + 1) * H * W * itemsize    # C target planes + 1 dpt plane
    tb = 1
    for cand in range(1, B + 1):
        if B % cand == 0 and 2 * cand * per_item <= budget_bytes:
            tb = cand
    return tb


@functools.partial(jax.jit, static_argnames=("beta",))
def smoothness_loss(dpt, target, beta=1.0):
    """dpt: (B, H, W) or (B, 1, H, W); target: (B, C, H, W) -> shape-(1,) loss."""
    B, C, H, W = target.shape
    d = dpt.reshape(B, H, W)                 # no-op if already (B, H, W)

    itemsize = max(jnp.dtype(d.dtype).itemsize, jnp.dtype(target.dtype).itemsize)
    tb = _pick_batch_tile(B, C, H, W, itemsize)
    nb = B // tb

    # beta and the mean normalization folded into each block's partial sum.
    scale = float(beta) / float(B * C * H * W)

    out = pl.pallas_call(
        functools.partial(_smoothness_kernel, scale=scale),
        out_shape=jax.ShapeDtypeStruct((nb, 8, 128), jnp.float32),
        grid_spec=pltpu.PrefetchScalarGridSpec(
            num_scalar_prefetch=0,
            grid=(nb,),
            in_specs=[
                pl.BlockSpec((tb, H, W), lambda b: (b, 0, 0)),        # dpt tile
                pl.BlockSpec((tb, C, H, W), lambda b: (b, 0, 0, 0)),  # target
            ],
            out_specs=pl.BlockSpec((1, 8, 128), lambda b: (b, 0, 0)),  # partial
        ),
        compiler_params=pltpu.CompilerParams(
            dimension_semantics=("parallel",)),   # independent per-block sums
    )(d, target)

    return jnp.sum(out[:, 0, 0]).reshape(1)


def smoothness_ref(dpt, target, beta=1.0):
    """Pure-JAX reference mirroring the PyTorch module (for verification)."""
    def gradient(inp):
        dy = inp - jnp.pad(inp[:, :, :-1, :], ((0, 0), (0, 0), (1, 0), (0, 0)))
        dx = inp - jnp.pad(inp[:, :, :, :-1], ((0, 0), (0, 0), (0, 0), (1, 0)))
        return dx, dy

    gtx, gty = gradient(target)
    wx = jnp.exp(-jnp.abs(gtx)) * beta
    wy = jnp.exp(-jnp.abs(gty)) * beta
    dx, dy = gradient(dpt[:, None])
    dD = jnp.abs(dx) * wx + jnp.abs(dy) * wy
    return jnp.mean(dD).reshape(1)


if __name__ == "__main__":
    key = jax.random.PRNGKey(0)
    k1, k2 = jax.random.split(key)
    B, C, H, W = 2, 4, 16, 16
    dpt = jax.random.uniform(k1, (B, H, W), dtype=jnp.float32)      # depth map
    target = jax.random.uniform(k2, (B, C, H, W), dtype=jnp.float32)

    loss = jax.block_until_ready(smoothness_loss(dpt, target, beta=1.0))
    ref = jax.block_until_ready(smoothness_ref(dpt, target, beta=1.0))

    assert loss.shape == (1,), loss.shape
    assert bool(jnp.all(jnp.isfinite(loss))), "non-finite loss"
    assert jnp.allclose(loss, ref, rtol=1e-4, atol=1e-6), (loss, ref)
    print("KERNEL_OK")
</pallas_src>

<mosaic_0001>
module attributes {stable_mosaic.version = 11 : i64} {
  func.func @_smoothness_kernel(%arg0: i32, %arg1: memref<2x16x16xf32, #tpu.memory_space<vmem>>, %arg2: memref<2x4x16x16xf32, #tpu.memory_space<vmem>>, %arg3: memref<1x8x128xf32, #tpu.memory_space<vmem>>) attributes {dimension_semantics = [#tpu.dimension_semantics<parallel>], iteration_bounds = array<i64: 1>, scalar_prefetch = 0 : i64, scratch_operands = 0 : i64, tpu.core_type = #tpu.core_type<tc>, window_params = [{transform_indices = @transform_0, window_bounds = array<i64: 2, 16, 16>}, {transform_indices = @transform_1, window_bounds = array<i64: 2, 4, 16, 16>}, {transform_indices = @transform_2, window_bounds = array<i64: 1, 8, 128>}]} {
    %c0 = arith.constant 0 : index
    %c0_0 = arith.constant 0 : index
    %c0_1 = arith.constant 0 : index
    %0 = vector.load %arg1[%c0, %c0_0, %c0_1] : memref<2x16x16xf32, #tpu.memory_space<vmem>>, vector<2x16x16xf32>
    %c0_2 = arith.constant 0 : index
    %c0_3 = arith.constant 0 : index
    %c0_4 = arith.constant 0 : index
    %c0_5 = arith.constant 0 : index
    %1 = vector.load %arg2[%c0_2, %c0_3, %c0_4, %c0_5] : memref<2x4x16x16xf32, #tpu.memory_space<vmem>>, vector<2x4x16x16xf32>
    %2 = tpu.iota {dimensions = array<i32: 1>} : vector<2x16x16xi32>
    %3 = tpu.iota {dimensions = array<i32: 2>} : vector<2x16x16xi32>
    %c1_i32 = arith.constant 1 : i32
    %4 = tpu.dynamic_rotate %0 by %c1_i32 dim 1 : vector<2x16x16xf32>, i32 -> vector<2x16x16xf32>
    %c1_i32_6 = arith.constant 1 : i32
    %5 = tpu.dynamic_rotate %0 by %c1_i32_6 dim 2 : vector<2x16x16xf32>, i32 -> vector<2x16x16xf32>
    %c0_i32 = arith.constant 0 : i32
    %6 = vector.broadcast %c0_i32 : i32 to vector<2x16x16xi32>
    %7 = arith.cmpi eq, %2, %6 : vector<2x16x16xi32>
    %cst = arith.constant 0.000000e+00 : f32
    %8 = vector.broadcast %cst : f32 to vector<2x16x16xf32>
    %9 = arith.select %7, %8, %4 : vector<2x16x16xi1>, vector<2x16x16xf32>
    %10 = arith.subf %0, %9 : vector<2x16x16xf32>
    %c0_i32_7 = arith.constant 0 : i32
    %11 = vector.broadcast %c0_i32_7 : i32 to vector<2x16x16xi32>
    %12 = arith.cmpi eq, %3, %11 : vector<2x16x16xi32>
    %cst_8 = arith.constant 0.000000e+00 : f32
    %13 = vector.broadcast %cst_8 : f32 to vector<2x16x16xf32>
    %14 = arith.select %12, %13, %5 : vector<2x16x16xi1>, vector<2x16x16xf32>
    %15 = arith.subf %0, %14 : vector<2x16x16xf32>
    %16 = tpu.iota {dimensions = array<i32: 2>} : vector<2x4x16x16xi32>
    %17 = tpu.iota {dimensions = array<i32: 3>} : vector<2x4x16x16xi32>
    %c1_i32_9 = arith.constant 1 : i32
    %18 = tpu.dynamic_rotate %1 by %c1_i32_9 dim 2 : vector<2x4x16x16xf32>, i32 -> vector<2x4x16x16xf32>
    %c1_i32_10 = arith.constant 1 : i32
    %19 = tpu.dynamic_rotate %1 by %c1_i32_10 dim 3 : vector<2x4x16x16xf32>, i32 -> vector<2x4x16x16xf32>
    %c0_i32_11 = arith.constant 0 : i32
    %20 = vector.broadcast %c0_i32_11 : i32 to vector<2x4x16x16xi32>
    %21 = arith.cmpi eq, %16, %20 : vector<2x4x16x16xi32>
    %cst_12 = arith.constant 0.000000e+00 : f32
    %22 = vector.broadcast %cst_12 : f32 to vector<2x4x16x16xf32>
    %23 = arith.select %21, %22, %18 : vector<2x4x16x16xi1>, vector<2x4x16x16xf32>
    %24 = arith.subf %1, %23 : vector<2x4x16x16xf32>
    %c0_i32_13 = arith.constant 0 : i32
    %25 = vector.broadcast %c0_i32_13 : i32 to vector<2x4x16x16xi32>
    %26 = arith.cmpi eq, %17, %25 : vector<2x4x16x16xi32>
    %cst_14 = arith.constant 0.000000e+00 : f32
    %27 = vector.broadcast %cst_14 : f32 to vector<2x4x16x16xf32>
    %28 = arith.select %26, %27, %19 : vector<2x4x16x16xi1>, vector<2x4x16x16xf32>
    %29 = arith.subf %1, %28 : vector<2x4x16x16xf32>
    %30 = math.absf %29 : vector<2x4x16x16xf32>
    %cst_15 = arith.constant 0.000000e+00 : f32
    %31 = vector.broadcast %cst_15 : f32 to vector<2x4x16x16xf32>
    %32 = arith.subf %31, %30 : vector<2x4x16x16xf32>
    %33 = math.exp %32 : vector<2x4x16x16xf32>
    %cst_16 = arith.constant dense<0.000000e+00> : vector<2x16x16xf32>
    %34 = vector.multi_reduction <add>, %33, %cst_16 [1] : vector<2x4x16x16xf32> to vector<2x16x16xf32>
    %35 = math.absf %24 : vector<2x4x16x16xf32>
    %cst_17 = arith.constant 0.000000e+00 : f32
    %36 = vector.broadcast %cst_17 : f32 to vector<2x4x16x16xf32>
    %37 = arith.subf %36, %35 : vector<2x4x16x16xf32>
    %38 = math.exp %37 : vector<2x4x16x16xf32>
    %cst_18 = arith.constant dense<0.000000e+00> : vector<2x16x16xf32>
    %39 = vector.multi_reduction <add>, %38, %cst_18 [1] : vector<2x4x16x16xf32> to vector<2x16x16xf32>
    %40 = math.absf %15 : vector<2x16x16xf32>
    %41 = arith.mulf %40, %34 : vector<2x16x16xf32>
    %42 = math.absf %10 : vector<2x16x16xf32>
    %43 = arith.mulf %42, %39 : vector<2x16x16xf32>
    %44 = arith.addf %41, %43 : vector<2x16x16xf32>
    %45 = vector.shape_cast %44 : vector<2x16x16xf32> to vector<1x2x16x16xf32>
    %cst_19 = arith.constant dense<0.000000e+00> : vector<1xf32>
    %46 = vector.multi_reduction <add>, %45, %cst_19 [1, 2, 3] : vector<1x2x16x16xf32> to vector<1xf32>
    %47 = vector.shape_cast %46 : vector<1xf32> to vector<1x1x1x1xf32>
    %48 = vector.extract %47[0, 0, 0, 0] : f32 from vector<1x1x1x1xf32>
    %cst_20 = arith.constant 4.8828125E-4 : f32
    %49 = arith.mulf %48, %cst_20 : f32
    %50 = vector.broadcast %49 : f32 to vector<1x8x128xf32>
    %c0_21 = arith.constant 0 : index
    %c0_22 = arith.constant 0 : index
    %c0_23 = arith.constant 0 : index
    %51 = vector.load %arg3[%c0_21, %c0_22, %c0_23] : memref<1x8x128xf32, #tpu.memory_space<vmem>>, vector<1x8x128xf32>
    tpu.vector_store %arg3[%c0_21, %c0_22, %c0_23], %50 {strides = array<i32>} : memref<1x8x128xf32, #tpu.memory_space<vmem>>, vector<1x8x128xf32>,
    return
  }
  func.func @transform_0(%arg0: i32) -> (i32, i32, i32) {
    %c0_i32 = arith.constant 0 : i32
    %c0_i32_0 = arith.constant 0 : i32
    %c0_i32_1 = arith.constant 0 : i32
    return %arg0, %c0_i32, %c0_i32_0 : i32, i32, i32
  }
  func.func @transform_1(%arg0: i32) -> (i32, i32, i32, i32) {
    %c0_i32 = arith.constant 0 : i32
    %c0_i32_0 = arith.constant 0 : i32
    %c0_i32_1 = arith.constant 0 : i32
    %c0_i32_2 = arith.constant 0 : i32
    return %arg0, %c0_i32, %c0_i32_0, %c0_i32_1 : i32, i32, i32, i32
  }
  func.func @transform_2(%arg0: i32) -> (i32, i32, i32) {
    %c0_i32 = arith.constant 0 : i32
    %c0_i32_0 = arith.constant 0 : i32
    %c0_i32_1 = arith.constant 0 : i32
    return %arg0, %c0_i32, %c0_i32_0 : i32, i32, i32
  }
}

</mosaic_0001>

<llo_original>
// kernel: smoothness_loss.1
$region0: #{smoothness_loss.1}
  #allocation0 [shape = 'u32[]', space=smem, size = 0x4, offset = 0x4, fixed_abs, tag = 'smem constant byte address 0x4 - core index']
  #allocation1 [shape = 'u32[144,128]{1,0:T(1,128)}', space=vmem, size = 0x12000, scoped, tag = 'internal scratch']
  %s0 = inlined_call_operand.hbm [shape: f32[2,16,16], index: 0, kind: input, shape index: {}]
  %s1 = inlined_call_operand.hbm [shape: f32[2,4,16,16], index: 1, kind: input, shape index: {}]
  %s2 = inlined_call_operand.vmem [shape: f32[1,8,128], index: 2, kind: output, shape index: {}]
  %s3 = sld [smem:[#allocation0]]
  $region26: #{smoothness_loss.1} parent=0
    _
  %s5 = ssub.s32 1, %s3
  %s6 = scalar_select 0, %s5, %s3
  $region1: #{smoothness_loss.1} parent=0
    #allocation2 [shape = 'u8[16384]{0}', space=vmem, size = 0x4000, scoped, tag = 'input window, operand 0, single buffered']
    #allocation3 [shape = 's32[1]{0}', space=sflag, size = 0x4, scoped, tag = 'scoped memory for smoothness_loss.1']
    #allocation4 [shape = 'u8[65536]{0}', space=vmem, size = 0x10000, scoped, tag = 'input window, operand 1, single buffered']
    #allocation5 [shape = 's32[1]{0}', space=sflag, size = 0x4, scoped, tag = 'scoped memory for smoothness_loss.1']
    %7 = vsyncpa [#allocation3], 0
    %8 = vsyncpa [#allocation5], 0
    // Predicated region
    $region2: #{smoothness_loss.1} parent=1 // pred_check
      _
    $region3: #{smoothness_loss.1} parent=1 // pred_check_branch
      %10 = sbr.rel (0) target = $region5
    $region4: #{smoothness_loss.1} parent=1 // pred_region
      %s12 = ssub.s32 512, 512
      %13 = vsyncadd [#allocation3], %s12
      %s14 = sshll.u32 [#allocation2], 4
      %s15 = int_to_ptr.vmem [resolvable:$true] %s14
      %20 = dma.hbm_to_vmem [thread:$0]  %s0, 512, %s15, [#allocation3], 128, 128, 8
    $region5: #{smoothness_loss.1} parent=1 // pred_fallthru
      _
    // Predicated region
    $region6: #{smoothness_loss.1} parent=1 // pred_check
      _
    $region7: #{smoothness_loss.1} parent=1 // pred_check_branch
      %22 = sbr.rel (0) target = $region9
    $region8: #{smoothness_loss.1} parent=1 // pred_region
      %s24 = ssub.s32 2048, 2048
      %25 = vsyncadd [#allocation5], %s24
      %s26 = sshll.u32 [#allocation4], 4
      %s27 = int_to_ptr.vmem [resolvable:$true] %s26
      %32 = dma.hbm_to_vmem [thread:$0]  %s1, 2048, %s27, [#allocation5], 128, 128, 8
    $region9: #{smoothness_loss.1} parent=1 // pred_fallthru
      _
    // Predicated region
    $region10: #{smoothness_loss.1} parent=1 // pred_check
      _
    $region11: #{smoothness_loss.1} parent=1 // pred_check_branch
      %34 = sbr.rel (0) target = $region13
    $region12: #{smoothness_loss.1} parent=1 // pred_region
      %35 = dma.done [#allocation3], 512
    $region13: #{smoothness_loss.1} parent=1 // pred_fallthru
      _
    // Predicated region
    $region14: #{smoothness_loss.1} parent=1 // pred_check
      _
    $region15: #{smoothness_loss.1} parent=1 // pred_check_branch
      %37 = sbr.rel (0) target = $region17
    $region16: #{smoothness_loss.1} parent=1 // pred_region
      %38 = dma.done [#allocation5], 2048
    $region17: #{smoothness_loss.1} parent=1 // pred_fallthru
      _
    %v39 = vld [vmem:[#allocation2] sm:$0xff]
    %v40 = vld [vmem:[#allocation2 + $0x8] sm:$0xff]
    %v41 = vld [vmem:[#allocation2 + $0x10] sm:$0xff]
    %v42 = vld [vmem:[#allocation2 + $0x18] sm:$0xff]
    %v43 = vld [vmem:[#allocation4] sm:$0xff]
    %v44 = vld [vmem:[#allocation4 + $0x8] sm:$0xff]
    %v45 = vld [vmem:[#allocation4 + $0x10] sm:$0xff]
    %v46 = vld [vmem:[#allocation4 + $0x18] sm:$0xff]
    %v47 = vld [vmem:[#allocation4 + $0x20] sm:$0xff]
    %v48 = vld [vmem:[#allocation4 + $0x28] sm:$0xff]
    %v49 = vld [vmem:[#allocation4 + $0x30] sm:$0xff]
    %v50 = vld [vmem:[#allocation4 + $0x38] sm:$0xff]
    %v51 = vld [vmem:[#allocation4 + $0x40] sm:$0xff]
    %v52 = vld [vmem:[#allocation4 + $0x48] sm:$0xff]
    %v53 = vld [vmem:[#allocation4 + $0x50] sm:$0xff]
    %v54 = vld [vmem:[#allocation4 + $0x58] sm:$0xff]
    %v55 = vld [vmem:[#allocation4 + $0x60] sm:$0xff]
    %v56 = vld [vmem:[#allocation4 + $0x68] sm:$0xff]
    %v57 = vld [vmem:[#allocation4 + $0x70] sm:$0xff]
    %v58 = vld [vmem:[#allocation4 + $0x78] sm:$0xff]
    %v59 = vlaneseq
    %v60 = vshrl.u32 %v59, 7
    %v61 = vadd.s32 %v60, 8
    %v62 = vlaneseq
    %v63 = vand.u32 %v62, 127
    %v64 = vrot.slane %v39, 7
    %v65 = vrot.slane %v41, 7
    %v66 = vrot.slane %v40, 7
    %v67 = vrot.slane %v42, 7
    %vm68 = vcmp.lt.s32.totalorder %v60, 1
    %v69 = vsel %vm68, %v64, %v66
    %v70 = vsel %vm68, %v65, %v67
    %v71 = vsel %vm68, %v66, %v64
    %v72 = vsel %vm68, %v67, %v65
    %vm73 = vcmask 1047680
    %74 = vrot.lane.b32.xlu0 %v39, 16
    %v75 = vpop.permute.xlu0 %74
    %v76 = vsel %vm73, %v75, %v39
    %77 = vrot.lane.b32.xlu0 %v40, 16
    %v78 = vpop.permute.xlu0 %77
    %v79 = vsel %vm73, %v78, %v40
    %80 = vrot.lane.b32.xlu0 %v41, 16
    %v81 = vpop.permute.xlu0 %80
    %v82 = vsel %vm73, %v81, %v41
    %83 = vrot.lane.b32.xlu0 %v42, 16
    %v84 = vpop.permute.xlu0 %83
    %v85 = vsel %vm73, %v84, %v42
    %86 = vrot.lane.b32.xlu0 %v76, 16
    %v87 = vpop.permute.xlu0 %86
    %88 = vrot.lane.b32.xlu0 %v79, 16
    %v89 = vpop.permute.xlu0 %88
    %90 = vrot.lane.b32.xlu0 %v82, 16
    %v91 = vpop.permute.xlu0 %90
    %92 = vrot.lane.b32.xlu0 %v85, 16
    %v93 = vpop.permute.xlu0 %92
    %v94 = vsel %vm73, %v87, %v39
    %v95 = vsel %vm73, %v89, %v40
    %v96 = vsel %vm73, %v91, %v41
    %v97 = vsel %vm73, %v93, %v42
    %vm98 = vcmp.eq.s32.totalorder %v60, 0
    %vm99 = vcmp.eq.s32.totalorder %v61, 0
    %v100 = vsel %vm98, 0.0, %v71
    %v101 = vsel %vm99, 0.0, %v69
    %v102 = vsel %vm98, 0.0, %v72
    %v103 = vsel %vm99, 0.0, %v70
    %v104 = vsub.f32 %v39, %v100
    %v105 = vsub.f32 %v40, %v101
    %v106 = vsub.f32 %v41, %v102
    %v107 = vsub.f32 %v42, %v103
    %vm108 = vcmp.eq.s32.totalorder %v63, 0
    %113 = vrot.lane.b32.xlu0 %v94, 113
    %v114 = vpop.permute.xlu0 %113
    %115 = vrot.lane.b32.xlu0 %v95, 113
    %v116 = vpop.permute.xlu0 %115
    %117 = vrot.lane.b32.xlu0 %v96, 113
    %v118 = vpop.permute.xlu0 %117
    %119 = vrot.lane.b32.xlu0 %v97, 113
    %v120 = vpop.permute.xlu0 %119
    %v125 = vsel %vm108, 0.0, %v114
    %v126 = vsel %vm108, 0.0, %v116
    %v127 = vsel %vm108, 0.0, %v118
    %v128 = vsel %vm108, 0.0, %v120
    %v129 = vsub.f32 %v39, %v125
    %v130 = vsub.f32 %v40, %v126
    %v131 = vsub.f32 %v41, %v127
    %v132 = vsub.f32 %v42, %v128
    %v133 = vrot.slane %v43, 7
    %v134 = vrot.slane %v45, 7
    %v135 = vrot.slane %v47, 7
    %v136 = vrot.slane %v49, 7
    %v137 = vrot.slane %v51, 7
    %v138 = vrot.slane %v53, 7
    %v139 = vrot.slane %v55, 7
    %v140 = vrot.slane %v57, 7
    %v141 = vrot.slane %v44, 7
    %v142 = vrot.slane %v46, 7
    %v143 = vrot.slane %v48, 7
    %v144 = vrot.slane %v50, 7
    %v145 = vrot.slane %v52, 7
    %v146 = vrot.slane %v54, 7
    %v147 = vrot.slane %v56, 7
    %v148 = vrot.slane %v58, 7
    %v149 = vsel %vm68, %v133, %v141
    %v150 = vsel %vm68, %v134, %v142
    %v151 = vsel %vm68, %v135, %v143
    %v152 = vsel %vm68, %v136, %v144
    %v153 = vsel %vm68, %v137, %v145
    %v154 = vsel %vm68, %v138, %v146
    %v155 = vsel %vm68, %v139, %v147
    %v156 = vsel %vm68, %v140, %v148
    %v157 = vsel %vm68, %v141, %v133
    %v158 = vsel %vm68, %v142, %v134
    %v159 = vsel %vm68, %v143, %v135
    %v160 = vsel %vm68, %v144, %v136
    %v161 = vsel %vm68, %v145, %v137
    %v162 = vsel %vm68, %v146, %v138
    %v163 = vsel %vm68, %v147, %v139
    %v164 = vsel %vm68, %v148, %v140
    %165 = vrot.lane.b32.xlu0 %v43, 16
    %v166 = vpop.permute.xlu0 %165
    %v167 = vsel %vm73, %v166, %v43
    %168 = vrot.lane.b32.xlu0 %v44, 16
    %v169 = vpop.permute.xlu0 %168
    %v170 = vsel %vm73, %v169, %v44
    %171 = vrot.lane.b32.xlu0 %v45, 16
    %v172 = vpop.permute.xlu0 %171
    %v173 = vsel %vm73, %v172, %v45
    %174 = vrot.lane.b32.xlu0 %v46, 16
    %v175 = vpop.permute.xlu0 %174
    %v176 = vsel %vm73, %v175, %v46
    %177 = vrot.lane.b32.xlu0 %v47, 16
    %v178 = vpop.permute.xlu0 %177
    %v179 = vsel %vm73, %v178, %v47
    %180 = vrot.lane.b32.xlu0 %v48, 16
    %v181 = vpop.permute.xlu0 %180
    %v182 = vsel %vm73, %v181, %v48
    %183 = vrot.lane.b32.xlu0 %v49, 16
    %v184 = vpop.permute.xlu0 %183
    %v185 = vsel %vm73, %v184, %v49
    %186 = vrot.lane.b32.xlu0 %v50, 16
    %v187 = vpop.permute.xlu0 %186
    %v188 = vsel %vm73, %v187, %v50
    %189 = vrot.lane.b32.xlu0 %v51, 16
    %v190 = vpop.permute.xlu0 %189
    %v191 = vsel %vm73, %v190, %v51
    %192 = vrot.lane.b32.xlu0 %v52, 16
    %v193 = vpop.permute.xlu0 %192
    %v194 = vsel %vm73, %v193, %v52
    %195 = vrot.lane.b32.xlu0 %v53, 16
    %v196 = vpop.permute.xlu0 %195
    %v197 = vsel %vm73, %v196, %v53
    %198 = vrot.lane.b32.xlu0 %v54, 16
    %v199 = vpop.permute.xlu0 %198
    %v200 = vsel %vm73, %v199, %v54
    %201 = vrot.lane.b32.xlu0 %v55, 16
    %v202 = vpop.permute.xlu0 %201
    %v203 = vsel %vm73, %v202, %v55
    %204 = vrot.lane.b32.xlu0 %v56, 16
    %v205 = vpop.permute.xlu0 %204
    %v206 = vsel %vm73, %v205, %v56
    %207 = vrot.lane.b32.xlu0 %v57, 16
    %v208 = vpop.permute.xlu0 %207
    %v209 = vsel %vm73, %v208, %v57
    %210 = vrot.lane.b32.xlu0 %v58, 16
    %v211 = vpop.permute.xlu0 %210
    %v212 = vsel %vm73, %v211, %v58
    %213 = vrot.lane.b32.xlu0 %v167, 16
    %v214 = vpop.permute.xlu0 %213
    %215 = vrot.lane.b32.xlu0 %v170, 16
    %v216 = vpop.permute.xlu0 %215
    %217 = vrot.lane.b32.xlu0 %v173, 16
    %v218 = vpop.permute.xlu0 %217
    %219 = vrot.lane.b32.xlu0 %v176, 16
    %v220 = vpop.permute.xlu0 %219
    %221 = vrot.lane.b32.xlu0 %v179, 16
    %v222 = vpop.permute.xlu0 %221
    %223 = vrot.lane.b32.xlu0 %v182, 16
    %v224 = vpop.permute.xlu0 %223
    %225 = vrot.lane.b32.xlu0 %v185, 16
    %v226 = vpop.permute.xlu0 %225
    %227 = vrot.lane.b32.xlu0 %v188, 16
    %v228 = vpop.permute.xlu0 %227
    %229 = vrot.lane.b32.xlu0 %v191, 16
    %v230 = vpop.permute.xlu0 %229
    %231 = vrot.lane.b32.xlu0 %v194, 16
    %v232 = vpop.permute.xlu0 %231
    %233 = vrot.lane.b32.xlu0 %v197, 16
    %v234 = vpop.permute.xlu0 %233
    %235 = vrot.lane.b32.xlu0 %v200, 16
    %v236 = vpop.permute.xlu0 %235
    %237 = vrot.lane.b32.xlu0 %v203, 16
    %v238 = vpop.permute.xlu0 %237
    %239 = vrot.lane.b32.xlu0 %v206, 16
    %v240 = vpop.permute.xlu0 %239
    %241 = vrot.lane.b32.xlu0 %v209, 16
    %v242 = vpop.permute.xlu0 %241
    %243 = vrot.lane.b32.xlu0 %v212, 16
    %v244 = vpop.permute.xlu0 %243
    %v245 = vsel %vm73, %v214, %v43
    %v246 = vsel %vm73, %v216, %v44
    %v247 = vsel %vm73, %v218, %v45
    %v248 = vsel %vm73, %v220, %v46
    %v249 = vsel %vm73, %v222, %v47
    %v250 = vsel %vm73, %v224, %v48
    %v251 = vsel %vm73, %v226, %v49
    %v252 = vsel %vm73, %v228, %v50
    %v253 = vsel %vm73, %v230, %v51
    %v254 = vsel %vm73, %v232, %v52
    %v255 = vsel %vm73, %v234, %v53
    %v256 = vsel %vm73, %v236, %v54
    %v257 = vsel %vm73, %v238, %v55
    %v258 = vsel %vm73, %v240, %v56
    %v259 = vsel %vm73, %v242, %v57
    %v260 = vsel %vm73, %v244, %v58
    %v261 = vsel %vm98, 0.0, %v157
    %v262 = vsel %vm99, 0.0, %v149
    %v263 = vsel %vm98, 0.0, %v158
    %v264 = vsel %vm99, 0.0, %v150
    %v265 = vsel %vm98, 0.0, %v159
    %v266 = vsel %vm99, 0.0, %v151
    %v267 = vsel %vm98, 0.0, %v160
    %v268 = vsel %vm99, 0.0, %v152
    %v269 = vsel %vm98, 0.0, %v161
    %v270 = vsel %vm99, 0.0, %v153
    %v271 = vsel %vm98, 0.0, %v162
    %v272 = vsel %vm99, 0.0, %v154
    %v273 = vsel %vm98, 0.0, %v163
    %v274 = vsel %vm99, 0.0, %v155
    %v275 = vsel %vm98, 0.0, %v164
    %v276 = vsel %vm99, 0.0, %v156
    %v277 = vsub.f32 %v43, %v261
    %v278 = vsub.f32 %v44, %v262
    %v279 = vsub.f32 %v45, %v263
    %v280 = vsub.f32 %v46, %v264
    %v281 = vsub.f32 %v47, %v265
    %v282 = vsub.f32 %v48, %v266
    %v283 = vsub.f32 %v49, %v267
    %v284 = vsub.f32 %v50, %v268
    %v285 = vsub.f32 %v51, %v269
    %v286 = vsub.f32 %v52, %v270
    %v287 = vsub.f32 %v53, %v271
    %v288 = vsub.f32 %v54, %v272
    %v289 = vsub.f32 %v55, %v273
    %v290 = vsub.f32 %v56, %v274
    %v291 = vsub.f32 %v57, %v275
    %v292 = vsub.f32 %v58, %v276
    %309 = vrot.lane.b32.xlu0 %v245, 113
    %v310 = vpop.permute.xlu0 %309
    %311 = vrot.lane.b32.xlu0 %v246, 113
    %v312 = vpop.permute.xlu0 %311
    %313 = vrot.lane.b32.xlu0 %v247, 113
    %v314 = vpop.permute.xlu0 %313
    %315 = vrot.lane.b32.xlu0 %v248, 113
    %v316 = vpop.permute.xlu0 %315
    %317 = vrot.lane.b32.xlu0 %v249, 113
    %v318 = vpop.permute.xlu0 %317
    %319 = vrot.lane.b32.xlu0 %v250, 113
    %v320 = vpop.permute.xlu0 %319
    %321 = vrot.lane.b32.xlu0 %v251, 113
    %v322 = vpop.permute.xlu0 %321
    %323 = vrot.lane.b32.xlu0 %v252, 113
    %v324 = vpop.permute.xlu0 %323
    %325 = vrot.lane.b32.xlu0 %v253, 113
    %v326 = vpop.permute.xlu0 %325
    %327 = vrot.lane.b32.xlu0 %v254, 113
    %v328 = vpop.permute.xlu0 %327
    %329 = vrot.lane.b32.xlu0 %v255, 113
    %v330 = vpop.permute.xlu0 %329
    %331 = vrot.lane.b32.xlu0 %v256, 113
    %v332 = vpop.permute.xlu0 %331
    %333 = vrot.lane.b32.xlu0 %v257, 113
    %v334 = vpop.permute.xlu0 %333
    %335 = vrot.lane.b32.xlu0 %v258, 113
    %v336 = vpop.permute.xlu0 %335
    %337 = vrot.lane.b32.xlu0 %v259, 113
    %v338 = vpop.permute.xlu0 %337
    %339 = vrot.lane.b32.xlu0 %v260, 113
    %v340 = vpop.permute.xlu0 %339
    %v357 = vsel %vm108, 0.0, %v310
    %v358 = vsel %vm108, 0.0, %v312
    %v359 = vsel %vm108, 0.0, %v314
    %v360 = vsel %vm108, 0.0, %v316
    %v361 = vsel %vm108, 0.0, %v318
    %v362 = vsel %vm108, 0.0, %v320
    %v363 = vsel %vm108, 0.0, %v322
    %v364 = vsel %vm108, 0.0, %v324
    %v365 = vsel %vm108, 0.0, %v326
    %v366 = vsel %vm108, 0.0, %v328
    %v367 = vsel %vm108, 0.0, %v330
    %v368 = vsel %vm108, 0.0, %v332
    %v369 = vsel %vm108, 0.0, %v334
    %v370 = vsel %vm108, 0.0, %v336
    %v371 = vsel %vm108, 0.0, %v338
    %v372 = vsel %vm108, 0.0, %v340
    %v373 = vsub.f32 %v43, %v357
    %v374 = vsub.f32 %v44, %v358
    %v375 = vsub.f32 %v45, %v359
    %v376 = vsub.f32 %v46, %v360
    %v377 = vsub.f32 %v47, %v361
    %v378 = vsub.f32 %v48, %v362
    %v379 = vsub.f32 %v49, %v363
    %v380 = vsub.f32 %v50, %v364
    %v381 = vsub.f32 %v51, %v365
    %v382 = vsub.f32 %v52, %v366
    %v383 = vsub.f32 %v53, %v367
    %v384 = vsub.f32 %v54, %v368
    %v385 = vsub.f32 %v55, %v369
    %v386 = vsub.f32 %v56, %v370
    %v387 = vsub.f32 %v57, %v371
    %v388 = vsub.f32 %v58, %v372
    %v389 = vand.u32 2147483647, %v373
    %v390 = vand.u32 2147483647, %v374
    %v391 = vand.u32 2147483647, %v375
    %v392 = vand.u32 2147483647, %v376
    %v393 = vand.u32 2147483647, %v377
    %v394 = vand.u32 2147483647, %v378
    %v395 = vand.u32 2147483647, %v379
    %v396 = vand.u32 2147483647, %v380
    %v397 = vand.u32 2147483647, %v381
    %v398 = vand.u32 2147483647, %v382
    %v399 = vand.u32 2147483647, %v383
    %v400 = vand.u32 2147483647, %v384
    %v401 = vand.u32 2147483647, %v385
    %v402 = vand.u32 2147483647, %v386
    %v403 = vand.u32 2147483647, %v387
    %v404 = vand.u32 2147483647, %v388
    %v405 = vsub.f32 0.0, %v389
    %v406 = vsub.f32 0.0, %v390
    %v407 = vsub.f32 0.0, %v391
    %v408 = vsub.f32 0.0, %v392
    %v409 = vsub.f32 0.0, %v393
    %v410 = vsub.f32 0.0, %v394
    %v411 = vsub.f32 0.0, %v395
    %v412 = vsub.f32 0.0, %v396
    %v413 = vsub.f32 0.0, %v397
    %v414 = vsub.f32 0.0, %v398
    %v415 = vsub.f32 0.0, %v399
    %v416 = vsub.f32 0.0, %v400
    %v417 = vsub.f32 0.0, %v401
    %v418 = vsub.f32 0.0, %v402
    %v419 = vsub.f32 0.0, %v403
    %v420 = vsub.f32 0.0, %v404
    %v421 = vmul.f32 %v405, 1.442695
    %v422 = vpow.pop %v421
    %v423 = vmul.f32 %v406, 1.442695
    %v424 = vpow.pop %v423
    %v425 = vmul.f32 %v407, 1.442695
    %v426 = vpow.pop %v425
    %v427 = vmul.f32 %v408, 1.442695
    %v428 = vpow.pop %v427
    %v429 = vmul.f32 %v409, 1.442695
    %v430 = vpow.pop %v429
    %v431 = vmul.f32 %v410, 1.442695
    %v432 = vpow.pop %v431
    %v433 = vmul.f32 %v411, 1.442695
    %v434 = vpow.pop %v433
    %v435 = vmul.f32 %v412, 1.442695
    %v436 = vpow.pop %v435
    %v437 = vmul.f32 %v413, 1.442695
    %v438 = vpow.pop %v437
    %v439 = vmul.f32 %v414, 1.442695
    %v440 = vpow.pop %v439
    %v441 = vmul.f32 %v415, 1.442695
    %v442 = vpow.pop %v441
    %v443 = vmul.f32 %v416, 1.442695
    %v444 = vpow.pop %v443
    %v445 = vmul.f32 %v417, 1.442695
    %v446 = vpow.pop %v445
    %v447 = vmul.f32 %v418, 1.442695
    %v448 = vpow.pop %v447
    %v449 = vmul.f32 %v419, 1.442695
    %v450 = vpow.pop %v449
    %v451 = vmul.f32 %v420, 1.442695
    %v452 = vpow.pop %v451
    %vm453 = vcmask 130048
    %v454 = vsel %vm453, %v422, 0.0
    %v455 = vsel %vm453, %v426, 0.0
    %v456 = vadd.f32 %v454, %v455
    %v457 = vsel %vm453, %v430, 0.0
    %v458 = vadd.f32 %v456, %v457
    %v459 = vsel %vm453, %v434, 0.0
    %v460 = vadd.f32 %v458, %v459
    %v461 = vsel %vm453, %v424, 0.0
    %v462 = vsel %vm453, %v428, 0.0
    %v463 = vadd.f32 %v461, %v462
    %v464 = vsel %vm453, %v432, 0.0
    %v465 = vadd.f32 %v463, %v464
    %v466 = vsel %vm453, %v436, 0.0
    %v467 = vadd.f32 %v465, %v466
    %v468 = vsel %vm453, %v438, 0.0
    %v469 = vsel %vm453, %v442, 0.0
    %v470 = vadd.f32 %v468, %v469
    %v471 = vsel %vm453, %v446, 0.0
    %v472 = vadd.f32 %v470, %v471
    %v473 = vsel %vm453, %v450, 0.0
    %v474 = vadd.f32 %v472, %v473
    %v475 = vsel %vm453, %v440, 0.0
    %v476 = vsel %vm453, %v444, 0.0
    %v477 = vadd.f32 %v475, %v476
    %v478 = vsel %vm453, %v448, 0.0
    %v479 = vadd.f32 %v477, %v478
    %v480 = vsel %vm453, %v452, 0.0
    %v481 = vadd.f32 %v479, %v480
    %v482 = vand.u32 2147483647, %v277
    %v483 = vand.u32 2147483647, %v278
    %v484 = vand.u32 2147483647, %v279
    %v485 = vand.u32 2147483647, %v280
    %v486 = vand.u32 2147483647, %v281
    %v487 = vand.u32 2147483647, %v282
    %v488 = vand.u32 2147483647, %v283
    %v489 = vand.u32 2147483647, %v284
    %v490 = vand.u32 2147483647, %v285
    %v491 = vand.u32 2147483647, %v286
    %v492 = vand.u32 2147483647, %v287
    %v493 = vand.u32 2147483647, %v288
    %v494 = vand.u32 2147483647, %v289
    %v495 = vand.u32 2147483647, %v290
    %v496 = vand.u32 2147483647, %v291
    %v497 = vand.u32 2147483647, %v292
    %v498 = vsub.f32 0.0, %v482
    %v499 = vsub.f32 0.0, %v483
    %v500 = vsub.f32 0.0, %v484
    %v501 = vsub.f32 0.0, %v485
    %v502 = vsub.f32 0.0, %v486
    %v503 = vsub.f32 0.0, %v487
    %v504 = vsub.f32 0.0, %v488
    %v505 = vsub.f32 0.0, %v489
    %v506 = vsub.f32 0.0, %v490
    %v507 = vsub.f32 0.0, %v491
    %v508 = vsub.f32 0.0, %v492
    %v509 = vsub.f32 0.0, %v493
    %v510 = vsub.f32 0.0, %v494
    %v511 = vsub.f32 0.0, %v495
    %v512 = vsub.f32 0.0, %v496
    %v513 = vsub.f32 0.0, %v497
    %v514 = vmul.f32 %v498, 1.442695
    %v515 = vpow.pop %v514
    %v516 = vmul.f32 %v499, 1.442695
    %v517 = vpow.pop %v516
    %v518 = vmul.f32 %v500, 1.442695
    %v519 = vpow.pop %v518
    %v520 = vmul.f32 %v501, 1.442695
    %v521 = vpow.pop %v520
    %v522 = vmul.f32 %v502, 1.442695
    %v523 = vpow.pop %v522
    %v524 = vmul.f32 %v503, 1.442695
    %v525 = vpow.pop %v524
    %v526 = vmul.f32 %v504, 1.442695
    %v527 = vpow.pop %v526
    %v528 = vmul.f32 %v505, 1.442695
    %v529 = vpow.pop %v528
    %v530 = vmul.f32 %v506, 1.442695
    %v531 = vpow.pop %v530
    %v532 = vmul.f32 %v507, 1.442695
    %v533 = vpow.pop %v532
    %v534 = vmul.f32 %v508, 1.442695
    %v535 = vpow.pop %v534
    %v536 = vmul.f32 %v509, 1.442695
    %v537 = vpow.pop %v536
    %v538 = vmul.f32 %v510, 1.442695
    %v539 = vpow.pop %v538
    %v540 = vmul.f32 %v511, 1.442695
    %v541 = vpow.pop %v540
    %v542 = vmul.f32 %v512, 1.442695
    %v543 = vpow.pop %v542
    %v544 = vmul.f32 %v513, 1.442695
    %v545 = vpow.pop %v544
    %v546 = vsel %vm453, %v515, 0.0
    %v547 = vsel %vm453, %v519, 0.0
    %v548 = vadd.f32 %v546, %v547
    %v549 = vsel %vm453, %v523, 0.0
    %v550 = vadd.f32 %v548, %v549
    %v551 = vsel %vm453, %v527, 0.0
    %v552 = vadd.f32 %v550, %v551
    %v553 = vsel %vm453, %v517, 0.0
    %v554 = vsel %vm453, %v521, 0.0
    %v555 = vadd.f32 %v553, %v554
    %v556 = vsel %vm453, %v525, 0.0
    %v557 = vadd.f32 %v555, %v556
    %v558 = vsel %vm453, %v529, 0.0
    %v559 = vadd.f32 %v557, %v558
    %v560 = vsel %vm453, %v531, 0.0
    %v561 = vsel %vm453, %v535, 0.0
    %v562 = vadd.f32 %v560, %v561
    %v563 = vsel %vm453, %v539, 0.0
    %v564 = vadd.f32 %v562, %v563
    %v565 = vsel %vm453, %v543, 0.0
    %v566 = vadd.f32 %v564, %v565
    %v567 = vsel %vm453, %v533, 0.0
    %v568 = vsel %vm453, %v537, 0.0
    %v569 = vadd.f32 %v567, %v568
    %v570 = vsel %vm453, %v541, 0.0
    %v571 = vadd.f32 %v569, %v570
    %v572 = vsel %vm453, %v545, 0.0
    %v573 = vadd.f32 %v571, %v572
    %v574 = vand.u32 2147483647, %v129
    %v575 = vand.u32 2147483647, %v130
    %v576 = vand.u32 2147483647, %v131
    %v577 = vand.u32 2147483647, %v132
    %v578 = vmul.f32 %v574, %v460
    %v579 = vmul.f32 %v575, %v467
    %v580 = vmul.f32 %v576, %v474
    %v581 = vmul.f32 %v577, %v481
    %v582 = vand.u32 2147483647, %v104
    %v583 = vand.u32 2147483647, %v105
    %v584 = vand.u32 2147483647, %v106
    %v585 = vand.u32 2147483647, %v107
    %v586 = vmul.f32 %v582, %v552
    %v587 = vmul.f32 %v583, %v559
    %v588 = vmul.f32 %v584, %v566
    %v589 = vmul.f32 %v585, %v573
    %v590 = vadd.f32 %v578, %v586
    %v591 = vadd.f32 %v579, %v587
    %v592 = vadd.f32 %v580, %v588
    %v593 = vadd.f32 %v581, %v589
    %v594 = vsel %vm453, %v590, 0.0
    %v595 = vsel %vm453, %v591, 0.0
    %v596 = vadd.f32 %v594, %v595
    %v597 = vsel %vm453, %v592, 0.0
    %v598 = vadd.f32 %v596, %v597
    %v599 = vsel %vm453, %v593, 0.0
    %v600 = vadd.f32 %v598, %v599
    %601 = vadd.xlane.f32.xlu0 %v600
    %v602 = vpop.xlane.xlu0 %601
    %v603 = vrot.slane %v602, 4
    %v604 = vadd.f32 %v602, %v603
    %v605 = vrot.slane %v604, 2
    %v606 = vadd.f32 %v604, %v605
    %v607 = vrot.slane %v606, 1
    %v608 = vadd.f32 %v606, %v607
    %s609 = vtos %v608
    %s610 = smul.f32 %s609, 0.00048828125
    %v611 = vstv %s610
    %612 = vst [vmem:[%s2] sm:$0xff] %v611
    // Predicated region
    $region18: #{smoothness_loss.1} parent=1 // pred_check
      _
    $region19: #{smoothness_loss.1} parent=1 // pred_check_branch
      %614 = sbr.rel (0) target = $region21
    $region20: #{smoothness_loss.1} parent=1 // pred_region
      _
    $region21: #{smoothness_loss.1} parent=1 // pred_fallthru
      _
    // Predicated region
    $region22: #{smoothness_loss.1} parent=1 // pred_check
      _
    $region23: #{smoothness_loss.1} parent=1 // pred_check_branch
      %616 = sbr.rel (0) target = $region25
    $region24: #{smoothness_loss.1} parent=1 // pred_region
      _
    $region25: #{smoothness_loss.1} parent=1 // pred_fallthru
      _
    %617 = vsyncpa [#allocation3], 1
    %618 = vsyncpa [#allocation5], 1

</llo_original>
